<compile_context>
chip_gen: v6e
topology: v6e:2x2x1
jax: 0.10.0
libtpu: 0.0.40
codegen_flags: <defaults>
</compile_context>

<pallas_src>
import jax
import jax.numpy as jnp
from jax.experimental import pallas as pl
from jax.experimental.pallas import tpu as pltpu

HIDDEN = 32     # hidden_size
OUTPUT = 64     # output_size (vocab)
MAXLEN = 128    # max_length (attention span)

# Weight-slab lane layout (all sub-blocks 128-aligned, zero padded):
#   [  0:128) attn_we        (x emb)
#   [128:160) comb_we        (x emb)
#   [160:256) zero pad
#   [256:384) attn_wh        (x hid)
#   [384:480) wh_r|wh_z|wh_n (x hid)
#   [480:512) zero pad
#   [512:544) comb_wa        (x attn_applied)
#   [544:640) zero pad
#   [640:736) wi_r|wi_z|wi_n (x relu-combined)
#   [736:768) zero pad
#   [768:832) out_w          (x h_new)
#   [832:896) zero pad
W_SLAB_LANES = 896

# Bias-slab lane layout:
#   [  0:128) attn_b | [128:160) comb_b | [160:256) bi_r|bi_z|bi_n
#   [256:352) bh_r|bh_z|bh_n | [352:416) out_b | [416:448) pad
B_SLAB_LANES = 448


def decoder_kernel(token_ref, emb_tab_ref, hid_ref, enc_ref, w_ref, b_ref, out_ref):
    f32 = jnp.float32
    tok = token_ref[0]                                    # scalar int32 from SMEM

    # In-kernel embedding gather (dropout = identity in eval mode).
    emb = emb_tab_ref[pl.ds(tok, 1), :]                   # (1, H)
    hid = hid_ref[...]                                    # (1, H)
    enc = enc_ref[...]                                    # (L, H)
    b = b_ref[...]                                        # (1, 448)

    # Fused emb-side projections: [attn_we | comb_we | pad]
    res_e = jnp.dot(emb, w_ref[:, 0:256], preferred_element_type=f32)     # (1, 256)
    # Fused hid-side projections: [attn_wh | wh_r|wh_z|wh_n | pad]
    res_h = jnp.dot(hid, w_ref[:, 256:512], preferred_element_type=f32)   # (1, 256)

    # attn = Linear(2H -> L) on cat(emb, hid), then softmax.
    attn_logits = res_e[:, 0:128] + res_h[:, 0:128] + b[:, 0:128]         # (1, L)
    m = jnp.max(attn_logits, axis=1, keepdims=True)
    e = jnp.exp(attn_logits - m)
    attn_w = e * pl.reciprocal(jnp.sum(e, axis=1, keepdims=True), approx=True)

    # attn_applied = attn_weights @ encoder_outputs  (the bmm)  -> (1, H)
    attn_applied = jnp.dot(attn_w, enc, preferred_element_type=f32)

    # attn_combine = Linear(2H -> H) on cat(emb, attn_applied), then ReLU.
    comb_a = jnp.dot(attn_applied, w_ref[:, 512:640], preferred_element_type=f32)
    combined = res_e[:, 128:160] + comb_a[:, 0:32] + b[:, 128:160]        # (1, H)
    x = jnp.maximum(combined, 0.0)

    # Single-step GRU (PyTorch gate order r, z, n); gi/gh are packed (1, 3H).
    gi = jnp.dot(x, w_ref[:, 640:768], preferred_element_type=f32)[:, 0:96] + b[:, 160:256]
    gh = res_h[:, 128:224] + b[:, 256:352]
    r = jax.nn.sigmoid(gi[:, 0:32] + gh[:, 0:32])
    z = jax.nn.sigmoid(gi[:, 32:64] + gh[:, 32:64])
    n = jnp.tanh(gi[:, 64:96] + r * gh[:, 64:96])
    h_new = (1.0 - z) * n + z * hid                                       # (1, H)

    # out = Linear(H -> O), then log_softmax (exact path).
    logits = jnp.dot(h_new, w_ref[:, 768:896], preferred_element_type=f32)[:, 0:64] + b[:, 352:416]
    lm = jnp.max(logits, axis=1, keepdims=True)
    shifted = logits - lm
    lse = jnp.log(jnp.sum(jnp.exp(shifted), axis=1, keepdims=True))
    logp = shifted - lse                                                  # (1, O)

    # Single lane-dense packed output: [attn_w | logp | h_new | pad].
    out_ref[:, 0:128] = attn_w
    out_ref[:, 128:192] = logp
    out_ref[:, 192:224] = h_new
    out_ref[:, 224:256] = jnp.zeros((1, 32), f32)


def make_params(key):
    ks = jax.random.split(key, 21)
    s = 0.1

    def rnd(k, shape):
        return jax.random.normal(k, shape, dtype=jnp.float32) * s

    return {
        "embedding": rnd(ks[0], (OUTPUT, HIDDEN)),
        # attn: Linear(2H -> L) split into embedded-half / hidden-half
        "attn_we": rnd(ks[1], (HIDDEN, MAXLEN)),
        "attn_wh": rnd(ks[2], (HIDDEN, MAXLEN)),
        "attn_b": rnd(ks[3], (1, MAXLEN)),
        # attn_combine: Linear(2H -> H) split into embedded-half / attn-half
        "comb_we": rnd(ks[4], (HIDDEN, HIDDEN)),
        "comb_wa": rnd(ks[5], (HIDDEN, HIDDEN)),
        "comb_b": rnd(ks[6], (1, HIDDEN)),
        # GRU weights, per gate (r, z, n), stored (in, out)
        "wi_r": rnd(ks[7], (HIDDEN, HIDDEN)),
        "wi_z": rnd(ks[8], (HIDDEN, HIDDEN)),
        "wi_n": rnd(ks[9], (HIDDEN, HIDDEN)),
        "wh_r": rnd(ks[10], (HIDDEN, HIDDEN)),
        "wh_z": rnd(ks[11], (HIDDEN, HIDDEN)),
        "wh_n": rnd(ks[12], (HIDDEN, HIDDEN)),
        "bi_r": rnd(ks[13], (1, HIDDEN)),
        "bi_z": rnd(ks[14], (1, HIDDEN)),
        "bi_n": rnd(ks[15], (1, HIDDEN)),
        "bh_r": rnd(ks[16], (1, HIDDEN)),
        "bh_z": rnd(ks[17], (1, HIDDEN)),
        "bh_n": rnd(ks[18], (1, HIDDEN)),
        # output projection
        "out_w": rnd(ks[19], (HIDDEN, OUTPUT)),
        "out_b": rnd(ks[20], (1, OUTPUT)),
    }


def pack_params(p):
    """Pack all decoder weights/biases into lane-dense VMEM slabs (done once)."""
    zw = lambda c: jnp.zeros((HIDDEN, c), jnp.float32)
    zb = lambda c: jnp.zeros((1, c), jnp.float32)
    w_slab = jnp.concatenate([
        p["attn_we"], p["comb_we"], zw(96),                 # [0:256)   x emb
        p["attn_wh"], p["wh_r"], p["wh_z"], p["wh_n"], zw(32),  # [256:512) x hid
        p["comb_wa"], zw(96),                               # [512:640) x attn_applied
        p["wi_r"], p["wi_z"], p["wi_n"], zw(32),            # [640:768) x combined
        p["out_w"], zw(64),                                 # [768:896) x h_new
    ], axis=1)
    assert w_slab.shape == (HIDDEN, W_SLAB_LANES)
    b_slab = jnp.concatenate([
        p["attn_b"], p["comb_b"],
        p["bi_r"], p["bi_z"], p["bi_n"],
        p["bh_r"], p["bh_z"], p["bh_n"],
        p["out_b"], zb(32),
    ], axis=1)
    assert b_slab.shape == (1, B_SLAB_LANES)
    return {"emb_table": p["embedding"], "w_slab": w_slab, "b_slab": b_slab}


@jax.jit
def decoder_forward(token, hidden, encoder_outputs, packed):
    tok = jnp.asarray(token, jnp.int32).reshape(1)
    hid0 = hidden.reshape(1, HIDDEN)

    vmem = pl.BlockSpec(memory_space=pltpu.MemorySpace.VMEM)
    smem = pl.BlockSpec(memory_space=pltpu.MemorySpace.SMEM)

    out = pl.pallas_call(
        decoder_kernel,
        out_shape=jax.ShapeDtypeStruct((1, 256), jnp.float32),
        in_specs=[smem, vmem, vmem, vmem, vmem, vmem],
        out_specs=vmem,
    )(tok, packed["emb_table"], hid0, encoder_outputs,
      packed["w_slab"], packed["b_slab"])

    attn_w = out[:, 0:128]                                  # (1, L)
    logp = out[:, 128:192]                                  # (1, O)
    new_hid = out[:, 192:224].reshape(1, 1, HIDDEN)         # (1, 1, H) (PyTorch shape)
    return logp, new_hid, attn_w


def decoder_ref(token, hidden, encoder_outputs, p):
    """Pure-JAX reference mirroring the PyTorch forward (eval mode)."""
    emb = p["embedding"][token].reshape(1, HIDDEN)
    hid = hidden[0]
    attn_logits = emb @ p["attn_we"] + hid @ p["attn_wh"] + p["attn_b"]
    attn_w = jax.nn.softmax(attn_logits, axis=1)
    attn_applied = attn_w @ encoder_outputs
    x = jax.nn.relu(emb @ p["comb_we"] + attn_applied @ p["comb_wa"] + p["comb_b"])
    gi_r = x @ p["wi_r"] + p["bi_r"]
    gi_z = x @ p["wi_z"] + p["bi_z"]
    gi_n = x @ p["wi_n"] + p["bi_n"]
    gh_r = hid @ p["wh_r"] + p["bh_r"]
    gh_z = hid @ p["wh_z"] + p["bh_z"]
    gh_n = hid @ p["wh_n"] + p["bh_n"]
    r = jax.nn.sigmoid(gi_r + gh_r)
    z = jax.nn.sigmoid(gi_z + gh_z)
    n = jnp.tanh(gi_n + r * gh_n)
    h_new = (1.0 - z) * n + z * hid
    logits = h_new @ p["out_w"] + p["out_b"]
    logp = jax.nn.log_softmax(logits, axis=1)
    return logp, h_new.reshape(1, 1, HIDDEN), attn_w


if __name__ == "__main__":
    key = jax.random.PRNGKey(0)
    kp, kh, ke = jax.random.split(key, 3)

    params = make_params(kp)
    packed = pack_params(params)

    token = jnp.int32(5)                                         # decoder input token id
    hidden = jax.random.normal(kh, (1, 1, HIDDEN), jnp.float32) * 0.1
    encoder_outputs = jax.random.normal(ke, (MAXLEN, HIDDEN), jnp.float32) * 0.1

    logp, new_hid, attn_w = decoder_forward(token, hidden, encoder_outputs, packed)
    jax.block_until_ready((logp, new_hid, attn_w))

    ref_logp, ref_hid, ref_attn = decoder_ref(token, hidden, encoder_outputs, params)
    # approx reciprocal in the attention softmax -> slightly loosened tolerances
    assert jnp.allclose(logp, ref_logp, atol=2e-3, rtol=2e-3)
    assert jnp.allclose(new_hid, ref_hid, atol=2e-3, rtol=2e-3)
    assert jnp.allclose(attn_w, ref_attn, atol=1e-3, rtol=1e-3)
    assert logp.shape == (1, OUTPUT) and new_hid.shape == (1, 1, HIDDEN) and attn_w.shape == (1, MAXLEN)

    print("KERNEL_OK")
</pallas_src>

<mosaic_0001>
module attributes {stable_mosaic.version = 11 : i64} {
  func.func @decoder_kernel(%arg0: memref<1xi32, #tpu.memory_space<smem>>, %arg1: memref<64x32xf32, #tpu.memory_space<vmem>>, %arg2: memref<1x32xf32, #tpu.memory_space<vmem>>, %arg3: memref<128x32xf32, #tpu.memory_space<vmem>>, %arg4: memref<32x896xf32, #tpu.memory_space<vmem>>, %arg5: memref<1x448xf32, #tpu.memory_space<vmem>>, %arg6: memref<1x256xf32, #tpu.memory_space<vmem>>) attributes {dimension_semantics = [], scalar_prefetch = 0 : i64, scratch_operands = 0 : i64, tpu.core_type = #tpu.core_type<tc>} {
    %c0 = arith.constant 0 : index
    %0 = memref.load %arg0[%c0] : memref<1xi32, #tpu.memory_space<smem>>
    %1 = arith.index_cast %0 : i32 to index
    %c0_0 = arith.constant 0 : index
    %2 = vector.load %arg1[%1, %c0_0] : memref<64x32xf32, #tpu.memory_space<vmem>>, vector<1x32xf32>
    %c0_1 = arith.constant 0 : index
    %c0_2 = arith.constant 0 : index
    %3 = vector.load %arg2[%c0_1, %c0_2] : memref<1x32xf32, #tpu.memory_space<vmem>>, vector<1x32xf32>
    %c0_3 = arith.constant 0 : index
    %c0_4 = arith.constant 0 : index
    %4 = vector.load %arg3[%c0_3, %c0_4] : memref<128x32xf32, #tpu.memory_space<vmem>>, vector<128x32xf32>
    %c0_5 = arith.constant 0 : index
    %c0_6 = arith.constant 0 : index
    %5 = vector.load %arg5[%c0_5, %c0_6] : memref<1x448xf32, #tpu.memory_space<vmem>>, vector<1x448xf32>
    %c0_7 = arith.constant 0 : index
    %c0_8 = arith.constant 0 : index
    %6 = vector.load %arg4[%c0_7, %c0_8] : memref<32x896xf32, #tpu.memory_space<vmem>>, vector<32x256xf32>
    %cst = arith.constant dense<0.000000e+00> : vector<1x256xf32>
    %7 = tpu.matmul %2, %6, %cst {dimension_numbers = #tpu.dot_dimension_numbers<[1], [0], [0], [1], [0, 0, 1, 1], [], []>} : vector<1x32xf32>, vector<32x256xf32>, vector<1x256xf32> -> vector<1x256xf32>
    %c0_9 = arith.constant 0 : index
    %c256 = arith.constant 256 : index
    %8 = vector.load %arg4[%c0_9, %c256] : memref<32x896xf32, #tpu.memory_space<vmem>>, vector<32x256xf32>
    %cst_10 = arith.constant dense<0.000000e+00> : vector<1x256xf32>
    %9 = tpu.matmul %3, %8, %cst_10 {dimension_numbers = #tpu.dot_dimension_numbers<[1], [0], [0], [1], [0, 0, 1, 1], [], []>} : vector<1x32xf32>, vector<32x256xf32>, vector<1x256xf32> -> vector<1x256xf32>
    %10 = vector.extract_strided_slice %7 {offsets = [0, 0], sizes = [1, 128], strides = [1, 1]} : vector<1x256xf32> to vector<1x128xf32>
    %11 = vector.extract_strided_slice %9 {offsets = [0, 0], sizes = [1, 128], strides = [1, 1]} : vector<1x256xf32> to vector<1x128xf32>
    %12 = arith.addf %10, %11 : vector<1x128xf32>
    %13 = vector.extract_strided_slice %5 {offsets = [0, 0], sizes = [1, 128], strides = [1, 1]} : vector<1x448xf32> to vector<1x128xf32>
    %14 = arith.addf %12, %13 : vector<1x128xf32>
    %cst_11 = arith.constant dense<0xFF800000> : vector<1xf32>
    %15 = vector.multi_reduction <maximumf>, %14, %cst_11 [1] : vector<1x128xf32> to vector<1xf32>
    %16 = vector.shape_cast %15 : vector<1xf32> to vector<1x1xf32>
    %17 = vector.broadcast %16 : vector<1x1xf32> to vector<1x128xf32>
    %18 = arith.subf %14, %17 : vector<1x128xf32>
    %19 = math.exp %18 : vector<1x128xf32>
    %cst_12 = arith.constant dense<0.000000e+00> : vector<1xf32>
    %20 = vector.multi_reduction <add>, %19, %cst_12 [1] : vector<1x128xf32> to vector<1xf32>
    %21 = vector.shape_cast %20 : vector<1xf32> to vector<1x1xf32>
    %22 = tpu.reciprocal %21 {approx = true} : vector<1x1xf32> -> vector<1x1xf32>
    %23 = vector.broadcast %22 : vector<1x1xf32> to vector<1x128xf32>
    %24 = arith.mulf %19, %23 : vector<1x128xf32>
    %cst_13 = arith.constant dense<0.000000e+00> : vector<1x32xf32>
    %25 = tpu.matmul %24, %4, %cst_13 {dimension_numbers = #tpu.dot_dimension_numbers<[1], [0], [0], [1], [0, 0, 1, 1], [], []>} : vector<1x128xf32>, vector<128x32xf32>, vector<1x32xf32> -> vector<1x32xf32>
    %c0_14 = arith.constant 0 : index
    %c512 = arith.constant 512 : index
    %26 = vector.load %arg4[%c0_14, %c512] : memref<32x896xf32, #tpu.memory_space<vmem>>, vector<32x128xf32>
    %cst_15 = arith.constant dense<0.000000e+00> : vector<1x128xf32>
    %27 = tpu.matmul %25, %26, %cst_15 {dimension_numbers = #tpu.dot_dimension_numbers<[1], [0], [0], [1], [0, 0, 1, 1], [], []>} : vector<1x32xf32>, vector<32x128xf32>, vector<1x128xf32> -> vector<1x128xf32>
    %28 = vector.extract_strided_slice %7 {offsets = [0, 128], sizes = [1, 32], strides = [1, 1]} : vector<1x256xf32> to vector<1x32xf32>
    %29 = vector.extract_strided_slice %27 {offsets = [0, 0], sizes = [1, 32], strides = [1, 1]} : vector<1x128xf32> to vector<1x32xf32>
    %30 = arith.addf %28, %29 : vector<1x32xf32>
    %31 = vector.extract_strided_slice %5 {offsets = [0, 128], sizes = [1, 32], strides = [1, 1]} : vector<1x448xf32> to vector<1x32xf32>
    %32 = arith.addf %30, %31 : vector<1x32xf32>
    %cst_16 = arith.constant 0.000000e+00 : f32
    %33 = vector.broadcast %cst_16 : f32 to vector<1x32xf32>
    %34 = arith.maximumf %32, %33 : vector<1x32xf32>
    %c0_17 = arith.constant 0 : index
    %c640 = arith.constant 640 : index
    %35 = vector.load %arg4[%c0_17, %c640] : memref<32x896xf32, #tpu.memory_space<vmem>>, vector<32x128xf32>
    %cst_18 = arith.constant dense<0.000000e+00> : vector<1x128xf32>
    %36 = tpu.matmul %34, %35, %cst_18 {dimension_numbers = #tpu.dot_dimension_numbers<[1], [0], [0], [1], [0, 0, 1, 1], [], []>} : vector<1x32xf32>, vector<32x128xf32>, vector<1x128xf32> -> vector<1x128xf32>
    %37 = vector.extract_strided_slice %36 {offsets = [0, 0], sizes = [1, 96], strides = [1, 1]} : vector<1x128xf32> to vector<1x96xf32>
    %38 = vector.extract_strided_slice %5 {offsets = [0, 160], sizes = [1, 96], strides = [1, 1]} : vector<1x448xf32> to vector<1x96xf32>
    %39 = arith.addf %37, %38 : vector<1x96xf32>
    %40 = vector.extract_strided_slice %9 {offsets = [0, 128], sizes = [1, 96], strides = [1, 1]} : vector<1x256xf32> to vector<1x96xf32>
    %41 = vector.extract_strided_slice %5 {offsets = [0, 256], sizes = [1, 96], strides = [1, 1]} : vector<1x448xf32> to vector<1x96xf32>
    %42 = arith.addf %40, %41 : vector<1x96xf32>
    %43 = vector.extract_strided_slice %39 {offsets = [0, 0], sizes = [1, 32], strides = [1, 1]} : vector<1x96xf32> to vector<1x32xf32>
    %44 = vector.extract_strided_slice %42 {offsets = [0, 0], sizes = [1, 32], strides = [1, 1]} : vector<1x96xf32> to vector<1x32xf32>
    %45 = arith.addf %43, %44 : vector<1x32xf32>
    %46 = arith.negf %45 : vector<1x32xf32>
    %47 = math.exp %46 : vector<1x32xf32>
    %cst_19 = arith.constant 1.000000e+00 : f32
    %48 = vector.broadcast %cst_19 : f32 to vector<1x32xf32>
    %49 = arith.addf %48, %47 : vector<1x32xf32>
    %50 = arith.divf %48, %49 : vector<1x32xf32>
    %51 = vector.extract_strided_slice %39 {offsets = [0, 32], sizes = [1, 32], strides = [1, 1]} : vector<1x96xf32> to vector<1x32xf32>
    %52 = vector.extract_strided_slice %42 {offsets = [0, 32], sizes = [1, 32], strides = [1, 1]} : vector<1x96xf32> to vector<1x32xf32>
    %53 = arith.addf %51, %52 : vector<1x32xf32>
    %54 = arith.negf %53 : vector<1x32xf32>
    %55 = math.exp %54 : vector<1x32xf32>
    %cst_20 = arith.constant 1.000000e+00 : f32
    %56 = vector.broadcast %cst_20 : f32 to vector<1x32xf32>
    %57 = arith.addf %56, %55 : vector<1x32xf32>
    %58 = arith.divf %56, %57 : vector<1x32xf32>
    %59 = vector.extract_strided_slice %39 {offsets = [0, 64], sizes = [1, 32], strides = [1, 1]} : vector<1x96xf32> to vector<1x32xf32>
    %60 = vector.extract_strided_slice %42 {offsets = [0, 64], sizes = [1, 32], strides = [1, 1]} : vector<1x96xf32> to vector<1x32xf32>
    %61 = arith.mulf %50, %60 : vector<1x32xf32>
    %62 = arith.addf %59, %61 : vector<1x32xf32>
    %63 = math.tanh %62 : vector<1x32xf32>
    %cst_21 = arith.constant 1.000000e+00 : f32
    %64 = vector.broadcast %cst_21 : f32 to vector<1x32xf32>
    %65 = arith.subf %64, %58 : vector<1x32xf32>
    %66 = arith.mulf %65, %63 : vector<1x32xf32>
    %67 = arith.mulf %58, %3 : vector<1x32xf32>
    %68 = arith.addf %66, %67 : vector<1x32xf32>
    %c0_22 = arith.constant 0 : index
    %c768 = arith.constant 768 : index
    %69 = vector.load %arg4[%c0_22, %c768] : memref<32x896xf32, #tpu.memory_space<vmem>>, vector<32x128xf32>
    %cst_23 = arith.constant dense<0.000000e+00> : vector<1x128xf32>
    %70 = tpu.matmul %68, %69, %cst_23 {dimension_numbers = #tpu.dot_dimension_numbers<[1], [0], [0], [1], [0, 0, 1, 1], [], []>} : vector<1x32xf32>, vector<32x128xf32>, vector<1x128xf32> -> vector<1x128xf32>
    %71 = vector.extract_strided_slice %70 {offsets = [0, 0], sizes = [1, 64], strides = [1, 1]} : vector<1x128xf32> to vector<1x64xf32>
    %72 = vector.extract_strided_slice %5 {offsets = [0, 352], sizes = [1, 64], strides = [1, 1]} : vector<1x448xf32> to vector<1x64xf32>
    %73 = arith.addf %71, %72 : vector<1x64xf32>
    %cst_24 = arith.constant dense<0xFF800000> : vector<1xf32>
    %74 = vector.multi_reduction <maximumf>, %73, %cst_24 [1] : vector<1x64xf32> to vector<1xf32>
    %75 = vector.shape_cast %74 : vector<1xf32> to vector<1x1xf32>
    %76 = vector.broadcast %75 : vector<1x1xf32> to vector<1x64xf32>
    %77 = arith.subf %73, %76 : vector<1x64xf32>
    %78 = math.exp %77 : vector<1x64xf32>
    %cst_25 = arith.constant dense<0.000000e+00> : vector<1xf32>
    %79 = vector.multi_reduction <add>, %78, %cst_25 [1] : vector<1x64xf32> to vector<1xf32>
    %80 = vector.shape_cast %79 : vector<1xf32> to vector<1x1xf32>
    %81 = math.log %80 : vector<1x1xf32>
    %82 = vector.broadcast %81 : vector<1x1xf32> to vector<1x64xf32>
    %83 = arith.subf %77, %82 : vector<1x64xf32>
    %c0_26 = arith.constant 0 : index
    %c0_27 = arith.constant 0 : index
    %84 = vector.load %arg6[%c0_26, %c0_27] : memref<1x256xf32, #tpu.memory_space<vmem>>, vector<1x128xf32>
    tpu.vector_store %arg6[%c0_26, %c0_27], %24 {strides = array<i32>} : memref<1x256xf32, #tpu.memory_space<vmem>>, vector<1x128xf32>,
    %c0_28 = arith.constant 0 : index
    %c128 = arith.constant 128 : index
    %85 = vector.load %arg6[%c0_28, %c128] : memref<1x256xf32, #tpu.memory_space<vmem>>, vector<1x64xf32>
    tpu.vector_store %arg6[%c0_28, %c128], %83 {strides = array<i32>} : memref<1x256xf32, #tpu.memory_space<vmem>>, vector<1x64xf32>,
    %c0_29 = arith.constant 0 : index
    %c192 = arith.constant 192 : index
    %86 = vector.load %arg6[%c0_29, %c192] : memref<1x256xf32, #tpu.memory_space<vmem>>, vector<1x32xf32>
    tpu.vector_store %arg6[%c0_29, %c192], %68 {strides = array<i32>} : memref<1x256xf32, #tpu.memory_space<vmem>>, vector<1x32xf32>,
    %cst_30 = arith.constant 0.000000e+00 : f32
    %87 = vector.broadcast %cst_30 : f32 to vector<1x32xf32>
    %c0_31 = arith.constant 0 : index
    %c224 = arith.constant 224 : index
    %88 = vector.load %arg6[%c0_31, %c224] : memref<1x256xf32, #tpu.memory_space<vmem>>, vector<1x32xf32>
    tpu.vector_store %arg6[%c0_31, %c224], %87 {strides = array<i32>} : memref<1x256xf32, #tpu.memory_space<vmem>>, vector<1x32xf32>,
    return
  }
}

</mosaic_0001>

<llo_original>
// kernel: decoder_forward.1
$region0: #{decoder_forward.1}
  #allocation0 [shape = 'u32[]', space=smem, size = 0x4, offset = 0x4, fixed_abs, tag = 'smem constant byte address 0x4 - core index']
  #allocation1 [shape = 'u32[144,128]{1,0:T(1,128)}', space=vmem, size = 0x12000, scoped, tag = 'internal scratch']
  #allocation2 [shape = 's32[1]{0:T(128)S(6)}', space=smem, size = 0x200, scoped, tag = 'scoped memory for decoder_forward.1']
  %s0 = inlined_call_operand.<no memory space> [shape: s32[1], index: 0, kind: input, shape index: {}]
  %s1 = inlined_call_operand.vmem [shape: f32[64,32], index: 1, kind: input, shape index: {}]
  %s2 = inlined_call_operand.vmem [shape: f32[1,32], index: 2, kind: input, shape index: {}]
  %s3 = inlined_call_operand.vmem [shape: f32[128,32], index: 3, kind: input, shape index: {}]
  %s4 = inlined_call_operand.vmem [shape: f32[32,896], index: 4, kind: input, shape index: {}]
  %s5 = inlined_call_operand.vmem [shape: f32[1,448], index: 5, kind: input, shape index: {}]
  %s6 = inlined_call_operand.vmem [shape: f32[1,256], index: 6, kind: output, shape index: {}]
  %s7 = sld [smem:[#allocation0]]
  $region34: #{decoder_forward.1} parent=0
    _
  %s9 = ssub.s32 1, %s7
  %s10 = scalar_select 0, %s9, %s7
  %11 = sst [smem:[#allocation2]] %s0
  // Predicated region
  $region2: #{decoder_forward.1} parent=0 // pred_check
    _
  $region3: #{decoder_forward.1} parent=0 // pred_check_branch
    %13 = sbr.rel (0) target = $region5
  $region4: #{decoder_forward.1} parent=0 // pred_region
    _
  $region5: #{decoder_forward.1} parent=0 // pred_fallthru
    _
  // Predicated region
  $region6: #{decoder_forward.1} parent=0 // pred_check
    _
  $region7: #{decoder_forward.1} parent=0 // pred_check_branch
    %15 = sbr.rel (0) target = $region9
  $region8: #{decoder_forward.1} parent=0 // pred_region
    _
  $region9: #{decoder_forward.1} parent=0 // pred_fallthru
    _
  // Predicated region
  $region10: #{decoder_forward.1} parent=0 // pred_check
    _
  $region11: #{decoder_forward.1} parent=0 // pred_check_branch
    %17 = sbr.rel (0) target = $region13
  $region12: #{decoder_forward.1} parent=0 // pred_region
    _
  $region13: #{decoder_forward.1} parent=0 // pred_fallthru
    _
  // Predicated region
  $region14: #{decoder_forward.1} parent=0 // pred_check
    _
  $region15: #{decoder_forward.1} parent=0 // pred_check_branch
    %19 = sbr.rel (0) target = $region17
  $region16: #{decoder_forward.1} parent=0 // pred_region
    _
  $region17: #{decoder_forward.1} parent=0 // pred_fallthru
    _
  // Predicated region
  $region18: #{decoder_forward.1} parent=0 // pred_check
    _
  $region19: #{decoder_forward.1} parent=0 // pred_check_branch
    %21 = sbr.rel (0) target = $region21
  $region20: #{decoder_forward.1} parent=0 // pred_region
    _
  $region21: #{decoder_forward.1} parent=0 // pred_fallthru
    _
  // Predicated region
  $region22: #{decoder_forward.1} parent=0 // pred_check
    _
  $region23: #{decoder_forward.1} parent=0 // pred_check_branch
    %23 = sbr.rel (0) target = $region25
  $region24: #{decoder_forward.1} parent=0 // pred_region
    _
  $region25: #{decoder_forward.1} parent=0 // pred_fallthru
    _
  %s24 = sld [smem:[#allocation2]]
  %s25 = scalar_lea.vmem %s1, %s24
  %v26 = vld [vmem:[%s25] sm:$0x1]
  %v27 = vld [vmem:[%s2] sm:$0x1]
  %v28 = vld [vmem:[%s3] sm:$0xff]
  %v29 = vld [vmem:[%s3 + $0x8] sm:$0xff]
  %v30 = vld [vmem:[%s3 + $0x10] sm:$0xff]
  %v31 = vld [vmem:[%s3 + $0x18] sm:$0xff]
  %v32 = vld [vmem:[%s3 + $0x20] sm:$0xff]
  %v33 = vld [vmem:[%s3 + $0x28] sm:$0xff]
  %v34 = vld [vmem:[%s3 + $0x30] sm:$0xff]
  %v35 = vld [vmem:[%s3 + $0x38] sm:$0xff]
  %v36 = vld [vmem:[%s3 + $0x40] sm:$0xff]
  %v37 = vld [vmem:[%s3 + $0x48] sm:$0xff]
  %v38 = vld [vmem:[%s3 + $0x50] sm:$0xff]
  %v39 = vld [vmem:[%s3 + $0x58] sm:$0xff]
  %v40 = vld [vmem:[%s3 + $0x60] sm:$0xff]
  %v41 = vld [vmem:[%s3 + $0x68] sm:$0xff]
  %v42 = vld [vmem:[%s3 + $0x70] sm:$0xff]
  %v43 = vld [vmem:[%s3 + $0x78] sm:$0xff]
  %v44 = vld [vmem:[%s5] sm:$0xf]
  %v45 = vld [vmem:[%s4] sm:$0xff]
  %v46 = vld [vmem:[%s4 + $0x8] sm:$0xff]
  %v47 = vld [vmem:[%s4 + $0x38] sm:$0xff]
  %v48 = vld [vmem:[%s4 + $0x40] sm:$0xff]
  %v49 = vld [vmem:[%s4 + $0x70] sm:$0xff]
  %v50 = vld [vmem:[%s4 + $0x78] sm:$0xff]
  %v51 = vld [vmem:[%s4 + $0xa8] sm:$0xff]
  %v52 = vld [vmem:[%s4 + $0xb0] sm:$0xff]
  %vm53 = vcmask 261120
  %v55 = vsel %vm53, %v26, 0
  %57 = vmatprep.subr.mxu0 0.0
  %58 = vmatpush1.msra.mxu0 0.0
  %59 = vmatprep.subr.mxu0 0.0
  %60 = vmatpush1.msra.mxu0 0.0
  %61 = vmatprep.subr.mxu0 0.0
  %62 = vmatpush1.msra.mxu0 0.0
  %63 = vmatprep.subr.mxu0 0.0
  %64 = vmatpush1.msra.mxu0 0.0
  %65 = vmatprep.subr.mxu0 0.0
  %66 = vmatpush1.msra.mxu0 0.0
  %67 = vmatprep.subr.mxu0 0.0
  %68 = vmatpush1.msra.mxu0 0.0
  %69 = vmatprep.subr.mxu0 0.0
  %70 = vmatpush1.msra.mxu0 0.0
  %71 = vmatprep.subr.mxu0 0.0
  %72 = vmatpush1.msra.mxu0 0.0
  %73 = vmatprep.subr.mxu0 0.0
  %74 = vmatpush1.msra.mxu0 0.0
  %75 = vmatprep.subr.mxu0 0.0
  %76 = vmatpush1.msra.mxu0 0.0
  %77 = vmatprep.subr.mxu0 0.0
  %78 = vmatpush1.msra.mxu0 0.0
  %79 = vmatprep.subr.mxu0 0.0
  %80 = vmatpush1.msra.mxu0 0.0
  %81 = vmatprep.subr.mxu0 %v52
  %82 = vmatpush1.msra.mxu0 %v51
  %83 = vmatprep.subr.mxu0 %v50
  %84 = vmatpush1.msra.mxu0 %v49
  %85 = vmatprep.subr.mxu0 %v48
  %86 = vmatpush1.msra.mxu0 %v47
  %87 = vmatprep.subr.mxu0 %v46
  %88 = vmatpush1.msra.mxu0 %v45
  %89 = vmatprep.subr.mxu0 0.0
  %90 = vmatpush2.msra.mxu0 0.0
  %91 = vmatprep.subr.mxu0 0.0
  %92 = vmatpush2.msra.mxu0 0.0
  %93 = vmatprep.subr.mxu0 0.0
  %94 = vmatpush2.msra.mxu0 0.0
  %95 = vmatprep.subr.mxu0 0.0
  %96 = vmatpush2.msra.mxu0 0.0
  %97 = vmatprep.subr.mxu0 0.0
  %98 = vmatpush2.msra.mxu0 0.0
  %99 = vmatprep.subr.mxu0 0.0
  %100 = vmatpush2.msra.mxu0 0.0
  %101 = vmatprep.subr.mxu0 0.0
  %102 = vmatpush2.msra.mxu0 0.0
  %103 = vmatprep.subr.mxu0 0.0
  %104 = vmatpush2.msra.mxu0 0.0
  %105 = vmatprep.subr.mxu0 0.0
  %106 = vmatpush2.msra.mxu0 0.0
  %107 = vmatprep.subr.mxu0 0.0
  %108 = vmatpush2.msra.mxu0 0.0
  %109 = vmatprep.subr.mxu0 0.0
  %110 = vmatpush2.msra.mxu0 0.0
  %111 = vmatprep.subr.mxu0 0.0
  %112 = vmatpush2.msra.mxu0 0.0
  %113 = vmatprep.subr.mxu0 0.0
  %114 = vmatpush2.msra.mxu0 0.0
  %115 = vmatprep.subr.mxu0 0.0
  %116 = vmatpush2.msra.mxu0 0.0
  %117 = vmatprep.subr.mxu0 0.0
  %118 = vmatpush2.msra.mxu0 0.0
  %119 = vmatprep.subr.mxu0 0.0
  %120 = vmatpush2.msra.mxu0 0.0
  %121 = vmatprep.mubr.f32.mxu0 0.0
  %122 = vmatmul.mubr.f32.gmra.mxu0 %v55
  %v123 = vpop.f32.mrf.mxu0
  %v124 = vadd.f32 0.0, %v123
  %v125 = vpop.f32.mrf.mxu0
  %v126 = vadd.f32 0.0, %v125
  %127 = vdwg.mxu0
  %v128 = vld [vmem:[%s4 + $0x10] sm:$0xff]
  %v129 = vld [vmem:[%s4 + $0x18] sm:$0xff]
  %v130 = vld [vmem:[%s4 + $0x48] sm:$0xff]
  %v131 = vld [vmem:[%s4 + $0x50] sm:$0xff]
  %v132 = vld [vmem:[%s4 + $0x80] sm:$0xff]
  %v133 = vld [vmem:[%s4 + $0x88] sm:$0xff]
  %v134 = vld [vmem:[%s4 + $0xb8] sm:$0xff]
  %v135 = vld [vmem:[%s4 + $0xc0] sm:$0xff]
  %v137 = vsel %vm53, %v27, 0
  %139 = vmatprep.subr.mxu0 0.0
  %140 = vmatpush1.msra.mxu0 0.0
  %141 = vmatprep.subr.mxu0 0.0
  %142 = vmatpush1.msra.mxu0 0.0
  %143 = vmatprep.subr.mxu0 0.0
  %144 = vmatpush1.msra.mxu0 0.0
  %145 = vmatprep.subr.mxu0 0.0
  %146 = vmatpush1.msra.mxu0 0.0
  %147 = vmatprep.subr.mxu0 0.0
  %148 = vmatpush1.msra.mxu0 0.0
  %149 = vmatprep.subr.mxu0 0.0
  %150 = vmatpush1.msra.mxu0 0.0
  %151 = vmatprep.subr.mxu0 0.0
  %152 = vmatpush1.msra.mxu0 0.0
  %153 = vmatprep.subr.mxu0 0.0
  %154 = vmatpush1.msra.mxu0 0.0
  %155 = vmatprep.subr.mxu0 0.0
  %156 = vmatpush1.msra.mxu0 0.0
  %157 = vmatprep.subr.mxu0 0.0
  %158 = vmatpush1.msra.mxu0 0.0
  %159 = vmatprep.subr.mxu0 0.0
  %160 = vmatpush1.msra.mxu0 0.0
  %161 = vmatprep.subr.mxu0 0.0
  %162 = vmatpush1.msra.mxu0 0.0
  %163 = vmatprep.subr.mxu0 %v135
  %164 = vmatpush1.msra.mxu0 %v134
  %165 = vmatprep.subr.mxu0 %v133
  %166 = vmatpush1.msra.mxu0 %v132
  %167 = vmatprep.subr.mxu0 %v131
  %168 = vmatpush1.msra.mxu0 %v130
  %169 = vmatprep.subr.mxu0 %v129
  %170 = vmatpush1.msra.mxu0 %v128
  %171 = vmatprep.subr.mxu0 0.0
  %172 = vmatpush2.msra.mxu0 0.0
  %173 = vmatprep.subr.mxu0 0.0
  %174 = vmatpush2.msra.mxu0 0.0
  %175 = vmatprep.subr.mxu0 0.0
  %176 = vmatpush2.msra.mxu0 0.0
  %177 = vmatprep.subr.mxu0 0.0
  %178 = vmatpush2.msra.mxu0 0.0
  %179 = vmatprep.subr.mxu0 0.0
  %180 = vmatpush2.msra.mxu0 0.0
  %181 = vmatprep.subr.mxu0 0.0
  %182 = vmatpush2.msra.mxu0 0.0
  %183 = vmatprep.subr.mxu0 0.0
  %184 = vmatpush2.msra.mxu0 0.0
  %185 = vmatprep.subr.mxu0 0.0
  %186 = vmatpush2.msra.mxu0 0.0
  %187 = vmatprep.subr.mxu0 0.0
  %188 = vmatpush2.msra.mxu0 0.0
  %189 = vmatprep.subr.mxu0 0.0
  %190 = vmatpush2.msra.mxu0 0.0
  %191 = vmatprep.subr.mxu0 0.0
  %192 = vmatpush2.msra.mxu0 0.0
  %193 = vmatprep.subr.mxu0 0.0
  %194 = vmatpush2.msra.mxu0 0.0
  %195 = vmatprep.subr.mxu0 0.0
  %196 = vmatpush2.msra.mxu0 0.0
  %197 = vmatprep.subr.mxu0 0.0
  %198 = vmatpush2.msra.mxu0 0.0
  %199 = vmatprep.subr.mxu0 0.0
  %200 = vmatpush2.msra.mxu0 0.0
  %201 = vmatprep.subr.mxu0 0.0
  %202 = vmatpush2.msra.mxu0 0.0
  %203 = vmatprep.mubr.f32.mxu0 0.0
  %204 = vmatmul.mubr.f32.gmra.mxu0 %v137
  %v205 = vpop.f32.mrf.mxu0
  %v206 = vadd.f32 0.0, %v205
  %v207 = vpop.f32.mrf.mxu0
  %v208 = vadd.f32 0.0, %v207
  %209 = vdwg.mxu0
  %v210 = vadd.f32 %v124, %v206
  %v211 = vadd.f32 %v210, %v44
  %vm212 = vcmask 1040384
  %v213 = vsel %vm212, %v211, -inf
  %214 = vmax.xlane.f32.xlu0 %v213
  %v215 = vpop.xlane.xlu0 %214
  %v216 = vsub.f32 %v211, %v215
  %v217 = vmul.f32 %v216, 1.442695
  %v218 = vpow.pop %v217
  %v219 = vsel %vm212, %v218, 0.0
  %220 = vadd.xlane.f32.xlu0 %v219
  %v221 = vpop.xlane.xlu0 %220
  %v222 = vrcp.pop %v221
  %v223 = vmul.f32 %v218, %v222
  %224 = vmatprep.subr.mxu0 0.0
  %225 = vmatpush1.msra.mxu0 %v43
  %226 = vmatprep.subr.mxu0 0.0
  %227 = vmatpush1.msra.mxu0 %v42
  %228 = vmatprep.subr.mxu0 0.0
  %229 = vmatpush1.msra.mxu0 %v41
  %230 = vmatprep.subr.mxu0 0.0
  %231 = vmatpush1.msra.mxu0 %v40
  %232 = vmatprep.subr.mxu0 0.0
  %233 = vmatpush1.msra.mxu0 %v39
  %234 = vmatprep.subr.mxu0 0.0
  %235 = vmatpush1.msra.mxu0 %v38
  %236 = vmatprep.subr.mxu0 0.0
  %237 = vmatpush1.msra.mxu0 %v37
  %238 = vmatprep.subr.mxu0 0.0
  %239 = vmatpush1.msra.mxu0 %v36
  %240 = vmatprep.subr.mxu0 0.0
  %241 = vmatpush1.msra.mxu0 %v35
  %242 = vmatprep.subr.mxu0 0.0
  %243 = vmatpush1.msra.mxu0 %v34
  %244 = vmatprep.subr.mxu0 0.0
  %245 = vmatpush1.msra.mxu0 %v33
  %246 = vmatprep.subr.mxu0 0.0
  %247 = vmatpush1.msra.mxu0 %v32
  %248 = vmatprep.subr.mxu0 0.0
  %249 = vmatpush1.msra.mxu0 %v31
  %250 = vmatprep.subr.mxu0 0.0
  %251 = vmatpush1.msra.mxu0 %v30
  %252 = vmatprep.subr.mxu0 0.0
  %253 = vmatpush1.msra.mxu0 %v29
  %254 = vmatprep.subr.mxu0 0.0
  %255 = vmatpush1.msra.mxu0 %v28
  %256 = vmatprep.subr.mxu0 0.0
  %257 = vmatpush2.msra.mxu0 0.0
  %258 = vmatprep.subr.mxu0 0.0
  %259 = vmatpush2.msra.mxu0 0.0
  %260 = vmatprep.subr.mxu0 0.0
  %261 = vmatpush2.msra.mxu0 0.0
  %262 = vmatprep.subr.mxu0 0.0
  %263 = vmatpush2.msra.mxu0 0.0
  %264 = vmatprep.subr.mxu0 0.0
  %265 = vmatpush2.msra.mxu0 0.0
  %266 = vmatprep.subr.mxu0 0.0
  %267 = vmatpush2.msra.mxu0 0.0
  %268 = vmatprep.subr.mxu0 0.0
  %269 = vmatpush2.msra.mxu0 0.0
  %270 = vmatprep.subr.mxu0 0.0
  %271 = vmatpush2.msra.mxu0 0.0
  %272 = vmatprep.subr.mxu0 0.0
  %273 = vmatpush2.msra.mxu0 0.0
  %274 = vmatprep.subr.mxu0 0.0
  %275 = vmatpush2.msra.mxu0 0.0
  %276 = vmatprep.subr.mxu0 0.0
  %277 = vmatpush2.msra.mxu0 0.0
  %278 = vmatprep.subr.mxu0 0.0
  %279 = vmatpush2.msra.mxu0 0.0
  %280 = vmatprep.subr.mxu0 0.0
  %281 = vmatpush2.msra.mxu0 0.0
  %282 = vmatprep.subr.mxu0 0.0
  %283 = vmatpush2.msra.mxu0 0.0
  %284 = vmatprep.subr.mxu0 0.0
  %285 = vmatpush2.msra.mxu0 0.0
  %286 = vmatprep.subr.mxu0 0.0
  %287 = vmatpush2.msra.mxu0 0.0
  %288 = vmatprep.mubr.f32.mxu0 0.0
  %289 = vmatmul.mubr.f32.gmra.mxu0 %v223
  %v290 = vpop.f32.mrf.mxu0
  %v291 = vadd.f32 0.0, %v290
  %v292 = vpop.f32.mrf.mxu0
  %293 = vdwg.mxu0
  %v294 = vld [vmem:[%s4 + $0x20] sm:$0xff]
  %v295 = vld [vmem:[%s4 + $0x58] sm:$0xff]
  %v296 = vld [vmem:[%s4 + $0x90] sm:$0xff]
  %v297 = vld [vmem:[%s4 + $0xc8] sm:$0xff]
  %v299 = vsel %vm53, %v291, 0
  %301 = vmatprep.subr.mxu0 0.0
  %302 = vmatpush1.msra.mxu0 0.0
  %303 = vmatprep.subr.mxu0 0.0
  %304 = vmatpush1.msra.mxu0 0.0
  %305 = vmatprep.subr.mxu0 0.0
  %306 = vmatpush1.msra.mxu0 0.0
  %307 = vmatprep.subr.mxu0 0.0
  %308 = vmatpush1.msra.mxu0 0.0
  %309 = vmatprep.subr.mxu0 0.0
  %310 = vmatpush1.msra.mxu0 0.0
  %311 = vmatprep.subr.mxu0 0.0
  %312 = vmatpush1.msra.mxu0 0.0
  %313 = vmatprep.subr.mxu0 0.0
  %314 = vmatpush1.msra.mxu0 0.0
  %315 = vmatprep.subr.mxu0 0.0
  %316 = vmatpush1.msra.mxu0 0.0
  %317 = vmatprep.subr.mxu0 0.0
  %318 = vmatpush1.msra.mxu0 0.0
  %319 = vmatprep.subr.mxu0 0.0
  %320 = vmatpush1.msra.mxu0 0.0
  %321 = vmatprep.subr.mxu0 0.0
  %322 = vmatpush1.msra.mxu0 0.0
  %323 = vmatprep.subr.mxu0 0.0
  %324 = vmatpush1.msra.mxu0 0.0
  %325 = vmatprep.subr.mxu0 0.0
  %326 = vmatpush1.msra.mxu0 %v297
  %327 = vmatprep.subr.mxu0 0.0
  %328 = vmatpush1.msra.mxu0 %v296
  %329 = vmatprep.subr.mxu0 0.0
  %330 = vmatpush1.msra.mxu0 %v295
  %331 = vmatprep.subr.mxu0 0.0
  %332 = vmatpush1.msra.mxu0 %v294
  %333 = vmatprep.subr.mxu0 0.0
  %334 = vmatpush2.msra.mxu0 0.0
  %335 = vmatprep.subr.mxu0 0.0
  %336 = vmatpush2.msra.mxu0 0.0
  %337 = vmatprep.subr.mxu0 0.0
  %338 = vmatpush2.msra.mxu0 0.0
  %339 = vmatprep.subr.mxu0 0.0
  %340 = vmatpush2.msra.mxu0 0.0
  %341 = vmatprep.subr.mxu0 0.0
  %342 = vmatpush2.msra.mxu0 0.0
  %343 = vmatprep.subr.mxu0 0.0
  %344 = vmatpush2.msra.mxu0 0.0
  %345 = vmatprep.subr.mxu0 0.0
  %346 = vmatpush2.msra.mxu0 0.0
  %347 = vmatprep.subr.mxu0 0.0
  %348 = vmatpush2.msra.mxu0 0.0
  %349 = vmatprep.subr.mxu0 0.0
  %350 = vmatpush2.msra.mxu0 0.0
  %351 = vmatprep.subr.mxu0 0.0
  %352 = vmatpush2.msra.mxu0 0.0
  %353 = vmatprep.subr.mxu0 0.0
  %354 = vmatpush2.msra.mxu0 0.0
  %355 = vmatprep.subr.mxu0 0.0
  %356 = vmatpush2.msra.mxu0 0.0
  %357 = vmatprep.subr.mxu0 0.0
  %358 = vmatpush2.msra.mxu0 0.0
  %359 = vmatprep.subr.mxu0 0.0
  %360 = vmatpush2.msra.mxu0 0.0
  %361 = vmatprep.subr.mxu0 0.0
  %362 = vmatpush2.msra.mxu0 0.0
  %363 = vmatprep.subr.mxu0 0.0
  %364 = vmatpush2.msra.mxu0 0.0
  %365 = vmatprep.mubr.f32.mxu0 0.0
  %366 = vmatmul.mubr.f32.gmra.mxu0 %v299
  %v367 = vpop.f32.mrf.mxu0
  %v368 = vadd.f32 0.0, %v367
  %v369 = vpop.f32.mrf.mxu0
  %370 = vdwg.mxu0
  %v371 = vadd.f32 %v126, %v368
  %v373 = vlaneseq
  %v374 = vshrl.u32 %v373, 7
  %v375 = vsub.s32 1, %v374
  %v376 = vrot.slane %v44, %v375
  %v378 = vadd.f32 %v371, %v376
  %v379 = vmax.f32 %v378, 0.0
  %v380 = vld [vmem:[%s4 + $0x28] sm:$0xff]
  %v381 = vld [vmem:[%s4 + $0x60] sm:$0xff]
  %v382 = vld [vmem:[%s4 + $0x98] sm:$0xff]
  %v383 = vld [vmem:[%s4 + $0xd0] sm:$0xff]
  %v385 = vsel %vm53, %v379, 0
  %387 = vmatprep.subr.mxu0 0.0
  %388 = vmatpush1.msra.mxu0 0.0
  %389 = vmatprep.subr.mxu0 0.0
  %390 = vmatpush1.msra.mxu0 0.0
  %391 = vmatprep.subr.mxu0 0.0
  %392 = vmatpush1.msra.mxu0 0.0
  %393 = vmatprep.subr.mxu0 0.0
  %394 = vmatpush1.msra.mxu0 0.0
  %395 = vmatprep.subr.mxu0 0.0
  %396 = vmatpush1.msra.mxu0 0.0
  %397 = vmatprep.subr.mxu0 0.0
  %398 = vmatpush1.msra.mxu0 0.0
  %399 = vmatprep.subr.mxu0 0.0
  %400 = vmatpush1.msra.mxu0 0.0
  %401 = vmatprep.subr.mxu0 0.0
  %402 = vmatpush1.msra.mxu0 0.0
  %403 = vmatprep.subr.mxu0 0.0
  %404 = vmatpush1.msra.mxu0 0.0
  %405 = vmatprep.subr.mxu0 0.0
  %406 = vmatpush1.msra.mxu0 0.0
  %407 = vmatprep.subr.mxu0 0.0
  %408 = vmatpush1.msra.mxu0 0.0
  %409 = vmatprep.subr.mxu0 0.0
  %410 = vmatpush1.msra.mxu0 0.0
  %411 = vmatprep.subr.mxu0 0.0
  %412 = vmatpush1.msra.mxu0 %v383
  %413 = vmatprep.subr.mxu0 0.0
  %414 = vmatpush1.msra.mxu0 %v382
  %415 = vmatprep.subr.mxu0 0.0
  %416 = vmatpush1.msra.mxu0 %v381
  %417 = vmatprep.subr.mxu0 0.0
  %418 = vmatpush1.msra.mxu0 %v380
  %419 = vmatprep.subr.mxu0 0.0
  %420 = vmatpush2.msra.mxu0 0.0
  %421 = vmatprep.subr.mxu0 0.0
  %422 = vmatpush2.msra.mxu0 0.0
  %423 = vmatprep.subr.mxu0 0.0
  %424 = vmatpush2.msra.mxu0 0.0
  %425 = vmatprep.subr.mxu0 0.0
  %426 = vmatpush2.msra.mxu0 0.0
  %427 = vmatprep.subr.mxu0 0.0
  %428 = vmatpush2.msra.mxu0 0.0
  %429 = vmatprep.subr.mxu0 0.0
  %430 = vmatpush2.msra.mxu0 0.0
  %431 = vmatprep.subr.mxu0 0.0
  %432 = vmatpush2.msra.mxu0 0.0
  %433 = vmatprep.subr.mxu0 0.0
  %434 = vmatpush2.msra.mxu0 0.0
  %435 = vmatprep.subr.mxu0 0.0
  %436 = vmatpush2.msra.mxu0 0.0
  %437 = vmatprep.subr.mxu0 0.0
  %438 = vmatpush2.msra.mxu0 0.0
  %439 = vmatprep.subr.mxu0 0.0
  %440 = vmatpush2.msra.mxu0 0.0
  %441 = vmatprep.subr.mxu0 0.0
  %442 = vmatpush2.msra.mxu0 0.0
  %443 = vmatprep.subr.mxu0 0.0
  %444 = vmatpush2.msra.mxu0 0.0
  %445 = vmatprep.subr.mxu0 0.0
  %446 = vmatpush2.msra.mxu0 0.0
  %447 = vmatprep.subr.mxu0 0.0
  %448 = vmatpush2.msra.mxu0 0.0
  %449 = vmatprep.subr.mxu0 0.0
  %450 = vmatpush2.msra.mxu0 0.0
  %451 = vmatprep.mubr.f32.mxu0 0.0
  %452 = vmatmul.mubr.f32.gmra.mxu0 %v385
  %v453 = vpop.f32.mrf.mxu0
  %v454 = vadd.f32 0.0, %v453
  %v455 = vpop.f32.mrf.mxu0
  %456 = vdwg.mxu0
  %457 = vrot.lane.b32.xlu0 %v376, 96
  %v458 = vpop.permute.xlu0 %457
  %v460 = vadd.f32 %v454, %v458
  %v461 = vlaneseq
  %v462 = vshrl.u32 %v461, 7
  %v463 = vsub.s32 2, %v462
  %v464 = vrot.slane %v44, %v463
  %v466 = vadd.f32 %v208, %v464
  %v467 = vadd.f32 %v460, %v466
  %v468 = vxor.u32 %v467, 2147483648
  %v469 = vmul.f32 %v468, 1.442695
  %v470 = vpow.pop %v469
  %v471 = vadd.f32 %v470, 1.0
  %v472 = vrcp.pop %v471
  %v473 = vmul.f32 1.0, %v472
  %475 = vrot.lane.b32.xlu0 %v466, 64
  %v476 = vpop.permute.xlu0 %475
  %v478 = vmul.f32 %v473, %v476
  %480 = vrot.lane.b32.xlu0 %v478, 64
  %v481 = vpop.permute.xlu0 %480
  %v483 = vadd.f32 %v460, %v481
  %v484 = vtanh.pop %v483
  %v485 = vsub.f32 1.0, %v473
  %487 = vrot.lane.b32.xlu0 %v484, 96
  %v488 = vpop.permute.xlu0 %487
  %v490 = vmul.f32 %v485, %v488
  %v491 = vlaneseq
  %v492 = vshrl.u32 %v491, 7
  %v493 = vsub.s32 0, %v492
  %v494 = vrot.slane %v27, %v493
  %495 = vrot.lane.b32.xlu0 %v494, 32
  %v496 = vpop.permute.xlu0 %495
  %v498 = vmul.f32 %v473, %v496
  %v499 = vadd.f32 %v490, %v498
  %v500 = vld [vmem:[%s4 + $0x30] sm:$0xff]
  %v501 = vld [vmem:[%s4 + $0x68] sm:$0xff]
  %v502 = vld [vmem:[%s4 + $0xa0] sm:$0xff]
  %v503 = vld [vmem:[%s4 + $0xd8] sm:$0xff]
  %505 = vrot.lane.b32.xlu0 %v499, 96
  %v506 = vpop.permute.xlu0 %505
  %v507 = vsel %vm53, %v506, 0
  %509 = vmatprep.subr.mxu0 0.0
  %510 = vmatpush1.msra.mxu0 0.0
  %511 = vmatprep.subr.mxu0 0.0
  %512 = vmatpush1.msra.mxu0 0.0
  %513 = vmatprep.subr.mxu0 0.0
  %514 = vmatpush1.msra.mxu0 0.0
  %515 = vmatprep.subr.mxu0 0.0
  %516 = vmatpush1.msra.mxu0 0.0
  %517 = vmatprep.subr.mxu0 0.0
  %518 = vmatpush1.msra.mxu0 0.0
  %519 = vmatprep.subr.mxu0 0.0
  %520 = vmatpush1.msra.mxu0 0.0
  %521 = vmatprep.subr.mxu0 0.0
  %522 = vmatpush1.msra.mxu0 0.0
  %523 = vmatprep.subr.mxu0 0.0
  %524 = vmatpush1.msra.mxu0 0.0
  %525 = vmatprep.subr.mxu0 0.0
  %526 = vmatpush1.msra.mxu0 0.0
  %527 = vmatprep.subr.mxu0 0.0
  %528 = vmatpush1.msra.mxu0 0.0
  %529 = vmatprep.subr.mxu0 0.0
  %530 = vmatpush1.msra.mxu0 0.0
  %531 = vmatprep.subr.mxu0 0.0
  %532 = vmatpush1.msra.mxu0 0.0
  %533 = vmatprep.subr.mxu0 0.0
  %534 = vmatpush1.msra.mxu0 %v503
  %535 = vmatprep.subr.mxu0 0.0
  %536 = vmatpush1.msra.mxu0 %v502
  %537 = vmatprep.subr.mxu0 0.0
  %538 = vmatpush1.msra.mxu0 %v501
  %539 = vmatprep.subr.mxu0 0.0
  %540 = vmatpush1.msra.mxu0 %v500
  %541 = vmatprep.subr.mxu0 0.0
  %542 = vmatpush2.msra.mxu0 0.0
  %543 = vmatprep.subr.mxu0 0.0
  %544 = vmatpush2.msra.mxu0 0.0
  %545 = vmatprep.subr.mxu0 0.0
  %546 = vmatpush2.msra.mxu0 0.0
  %547 = vmatprep.subr.mxu0 0.0
  %548 = vmatpush2.msra.mxu0 0.0
  %549 = vmatprep.subr.mxu0 0.0
  %550 = vmatpush2.msra.mxu0 0.0
  %551 = vmatprep.subr.mxu0 0.0
  %552 = vmatpush2.msra.mxu0 0.0
  %553 = vmatprep.subr.mxu0 0.0
  %554 = vmatpush2.msra.mxu0 0.0
  %555 = vmatprep.subr.mxu0 0.0
  %556 = vmatpush2.msra.mxu0 0.0
  %557 = vmatprep.subr.mxu0 0.0
  %558 = vmatpush2.msra.mxu0 0.0
  %559 = vmatprep.subr.mxu0 0.0
  %560 = vmatpush2.msra.mxu0 0.0
  %561 = vmatprep.subr.mxu0 0.0
  %562 = vmatpush2.msra.mxu0 0.0
  %563 = vmatprep.subr.mxu0 0.0
  %564 = vmatpush2.msra.mxu0 0.0
  %565 = vmatprep.subr.mxu0 0.0
  %566 = vmatpush2.msra.mxu0 0.0
  %567 = vmatprep.subr.mxu0 0.0
  %568 = vmatpush2.msra.mxu0 0.0
  %569 = vmatprep.subr.mxu0 0.0
  %570 = vmatpush2.msra.mxu0 0.0
  %571 = vmatprep.subr.mxu0 0.0
  %572 = vmatpush2.msra.mxu0 0.0
  %573 = vmatprep.mubr.f32.mxu0 0.0
  %574 = vmatmul.mubr.f32.gmra.mxu0 %v507
  %v575 = vpop.f32.mrf.mxu0
  %v576 = vadd.f32 0.0, %v575
  %v577 = vpop.f32.mrf.mxu0
  %578 = vdwg.mxu0
  %v579 = vlaneseq
  %v580 = vshrl.u32 %v579, 7
  %v581 = vsub.s32 3, %v580
  %v582 = vrot.slane %v44, %v581
  %583 = vrot.lane.b32.xlu0 %v464, 32
  %v584 = vpop.permute.xlu0 %583
  %585 = vrot.lane.b32.xlu0 %v582, 32
  %v586 = vpop.permute.xlu0 %585
  %v587 = vsel %vm53, %v584, %v586
  %v589 = vadd.f32 %v576, %v587
  %vm590 = vcmask 516096
  %v591 = vsel %vm590, %v589, -inf
  %592 = vmax.xlane.f32.xlu0 %v591
  %v593 = vpop.xlane.xlu0 %592
  %v594 = vsub.f32 %v589, %v593
  %v595 = vmul.f32 %v594, 1.442695
  %v596 = vpow.pop %v595
  %v597 = vsel %vm590, %v596, 0.0
  %598 = vadd.xlane.f32.xlu0 %v597
  %v599 = vpop.xlane.xlu0 %598
  %v600 = vlog2.pop %v599
  %v601 = vmul.f32 %v600, 0.6931472
  %v602 = vsub.f32 %v594, %v601
  %v603 = vlaneseq
  %vm604 = vcmp.ge.s32.totalorder %v603, 0
  %vm605 = vcmp.lt.s32.totalorder %v603, 128
  %vm606 = vmand %vm604, %vm605
  %607 = vst.msk [vmem:[%s6] sm:$0x1] %vm606, %v223
  %vm608 = vcmp.lt.s32.totalorder %v603, 64
  %vm609 = vmand %vm604, %vm608
  %610 = vst.msk [vmem:[%s6 + $0x1] sm:$0x1] %vm609, %v602
  %v612 = vunpack.c.l.s4 1966171168
  %v613 = vunpack.c.0.s8 %v612
  %v614 = vlaneseq
  %v615 = vshrl.u32 %v614, 7
  %v616 = vsub.s32 %v613, %v615
  %v617 = vrot.slane %v499, %v616
  %v619 = vunpack.c.l.s4 1966171168
  %v620 = vunpack.c.0.s8 %v619
  %v621 = vlaneseq
  %v622 = vshrl.u32 %v621, 7
  %v623 = vsub.s32 %v620, %v622
  %v624 = vrot.slane %v617, %v623
  %625 = vrot.lane.b32.xlu0 %v624, 32
  %v626 = vpop.permute.xlu0 %625
  %vm628 = vcmp.ge.s32.totalorder %v603, 64
  %vm629 = vcmp.lt.s32.totalorder %v603, 96
  %vm630 = vmand %vm628, %vm629
  %631 = vst.msk [vmem:[%s6 + $0x1] sm:$0x1] %vm630, %v626
  %vm632 = vcmp.ge.s32.totalorder %v603, 96
  %vm633 = vmand %vm632, %vm605
  %634 = vst.msk [vmem:[%s6 + $0x1] sm:$0x1] %vm633, 0.0
  // Predicated region
  $region26: #{decoder_forward.1} parent=0 // pred_check
    _
  $region27: #{decoder_forward.1} parent=0 // pred_check_branch
    %636 = sbr.rel (0) target = $region29
  $region28: #{decoder_forward.1} parent=0 // pred_region
    _
  $region29: #{decoder_forward.1} parent=0 // pred_fallthru
    _
  // Predicated region
  $region30: #{decoder_forward.1} parent=0 // pred_check
    _
  $region31: #{decoder_forward.1} parent=0 // pred_check_branch
    %638 = sbr.rel (0) target = $region33
  $region32: #{decoder_forward.1} parent=0 // pred_region
    _
  $region33: #{decoder_forward.1} parent=0 // pred_fallthru
    _

</llo_original>
